<compile_context>
chip_gen: v6e
topology: v6e:2x2x1
jax: 0.10.0
libtpu: 0.0.40
codegen_flags: <defaults>
</compile_context>

<pallas_src>
import functools

import jax
import jax.numpy as jnp
from jax.experimental import pallas as pl
from jax.experimental.pallas import tpu as pltpu


def _ceil_to(x, m):
    return ((x + m - 1) // m) * m


IN_DIM, HID_DIM, OUT_DIM = 5, 64, 256
K1P = _ceil_to(IN_DIM, 128)     # 128 (lane-pad the K=5 axis)
N1P = _ceil_to(HID_DIM, 128)    # 128
N2P = _ceil_to(OUT_DIM, 128)    # 256


# ------------------------------ Pallas kernel -------------------------------
# y = relu(relu(x @ w1 + b1) @ w2 + b2), fused in one kernel.
# x, w1, w2 arrive as bf16 (MXU operands); accumulation and the elementwise
# epilogues (bias add, ReLU) are f32.

def _ner_mlp_kernel(x_ref, w1_ref, b1_ref, w2_ref, b2_ref, o_ref):
    h = jnp.dot(x_ref[...], w1_ref[...], preferred_element_type=jnp.float32)
    h = jnp.maximum(h + b1_ref[...], 0.0)
    y = jnp.dot(h.astype(jnp.bfloat16), w2_ref[...],
                preferred_element_type=jnp.float32)
    y = jnp.maximum(y + b2_ref[...], 0.0)
    o_ref[...] = y


# ------------------------------ param packing -------------------------------

def pack_ner_params(w1, b1, w2, b2):
    """Pre-pad + pre-cast weights once (no per-forward pad/transpose glue).

    w1: (5, 64), b1: (64,), w2: (64, 256), b2: (256,)  [x @ W layout]
    """
    w1p = jnp.zeros((K1P, N1P), jnp.bfloat16).at[:IN_DIM, :HID_DIM].set(
        w1.astype(jnp.bfloat16))
    b1p = jnp.zeros((1, N1P), jnp.float32).at[0, :HID_DIM].set(
        b1.astype(jnp.float32))
    w2p = jnp.zeros((N1P, N2P), jnp.bfloat16).at[:HID_DIM, :OUT_DIM].set(
        w2.astype(jnp.bfloat16))
    b2p = jnp.zeros((1, N2P), jnp.float32).at[0, :OUT_DIM].set(
        b2.astype(jnp.float32))
    return {"w1": w1p, "b1": b1p, "w2": w2p, "b2": b2p}


# --------------------------------- forward ----------------------------------

@jax.jit
def ner_encoder_fwd(packed, ner):
    """NerEncoder.forward: (B, 5) -> (B, 256)."""
    B = ner.shape[0]
    # Row padding: 16 keeps the bf16 sublane packing happy even when tiled.
    Mp = _ceil_to(max(B, 1), 16)
    if Mp >= 256:
        Mp = _ceil_to(Mp, 256)
        TM = 256
    else:
        TM = Mp

    xp = jnp.zeros((Mp, K1P), jnp.bfloat16).at[:B, :IN_DIM].set(
        ner.astype(jnp.bfloat16))

    out = pl.pallas_call(
        _ner_mlp_kernel,
        out_shape=jax.ShapeDtypeStruct((Mp, N2P), jnp.float32),
        grid=(Mp // TM,),
        in_specs=[pl.BlockSpec((TM, K1P), lambda i: (i, 0)),
                  pl.BlockSpec((K1P, N1P), lambda i: (0, 0)),
                  pl.BlockSpec((1, N1P), lambda i: (0, 0)),
                  pl.BlockSpec((N1P, N2P), lambda i: (0, 0)),
                  pl.BlockSpec((1, N2P), lambda i: (0, 0))],
        out_specs=pl.BlockSpec((TM, N2P), lambda i: (i, 0)),
        compiler_params=pltpu.CompilerParams(
            dimension_semantics=("parallel",)),
    )(xp, packed["w1"], packed["b1"], packed["w2"], packed["b2"])
    return out[:B, :OUT_DIM]


# ----------------------------------- main ------------------------------------

if __name__ == "__main__":
    B = 2
    key = jax.random.PRNGKey(0)
    k1, k2, k3, k4, k5 = jax.random.split(key, 5)

    # PyTorch nn.Linear default init: U(-1/sqrt(fan_in), 1/sqrt(fan_in)).
    bound1 = 1.0 / (IN_DIM ** 0.5)
    bound2 = 1.0 / (HID_DIM ** 0.5)
    w1 = jax.random.uniform(k1, (IN_DIM, HID_DIM), jnp.float32, -bound1, bound1)
    b1 = jax.random.uniform(k2, (HID_DIM,), jnp.float32, -bound1, bound1)
    w2 = jax.random.uniform(k3, (HID_DIM, OUT_DIM), jnp.float32, -bound2, bound2)
    b2 = jax.random.uniform(k4, (OUT_DIM,), jnp.float32, -bound2, bound2)

    ner = jax.random.normal(k5, (B, IN_DIM), dtype=jnp.float32)

    packed = pack_ner_params(w1, b1, w2, b2)
    out = ner_encoder_fwd(packed, ner)
    out = jax.block_until_ready(out)

    assert out.shape == (B, OUT_DIM)
    assert bool(jnp.all(jnp.isfinite(out)))

    # Pure-JAX f32 reference (bf16 MXU operands => loose tolerance).
    ref = jnp.maximum(jnp.maximum(ner @ w1 + b1, 0.0) @ w2 + b2, 0.0)
    assert bool(jnp.allclose(out, ref, rtol=2e-2, atol=1e-2))

    print("KERNEL_OK")
</pallas_src>

<mosaic_0001>
module attributes {stable_mosaic.version = 11 : i64} {
  func.func @_ner_mlp_kernel(%arg0: i32, %arg1: memref<16x128xbf16, #tpu.memory_space<vmem>>, %arg2: memref<128x128xbf16, #tpu.memory_space<vmem>>, %arg3: memref<1x128xf32, #tpu.memory_space<vmem>>, %arg4: memref<128x256xbf16, #tpu.memory_space<vmem>>, %arg5: memref<1x256xf32, #tpu.memory_space<vmem>>, %arg6: memref<16x256xf32, #tpu.memory_space<vmem>>) attributes {dimension_semantics = [#tpu.dimension_semantics<parallel>], iteration_bounds = array<i64: 1>, scalar_prefetch = 0 : i64, scratch_operands = 0 : i64, tpu.core_type = #tpu.core_type<tc>, window_params = [{transform_indices = @transform_0, window_bounds = array<i64: 16, 128>}, {pipeline_mode = #tpu.pipeline_mode<synchronous>, transform_indices = @transform_1, window_bounds = array<i64: 128, 128>}, {pipeline_mode = #tpu.pipeline_mode<synchronous>, transform_indices = @transform_2, window_bounds = array<i64: 1, 128>}, {pipeline_mode = #tpu.pipeline_mode<synchronous>, transform_indices = @transform_3, window_bounds = array<i64: 128, 256>}, {pipeline_mode = #tpu.pipeline_mode<synchronous>, transform_indices = @transform_4, window_bounds = array<i64: 1, 256>}, {transform_indices = @transform_5, window_bounds = array<i64: 16, 256>}]} {
    %c0 = arith.constant 0 : index
    %c0_0 = arith.constant 0 : index
    %0 = vector.load %arg1[%c0, %c0_0] : memref<16x128xbf16, #tpu.memory_space<vmem>>, vector<16x128xbf16>
    %c0_1 = arith.constant 0 : index
    %c0_2 = arith.constant 0 : index
    %1 = vector.load %arg2[%c0_1, %c0_2] : memref<128x128xbf16, #tpu.memory_space<vmem>>, vector<128x128xbf16>
    %cst = arith.constant dense<0.000000e+00> : vector<16x128xf32>
    %2 = tpu.matmul %0, %1, %cst {dimension_numbers = #tpu.dot_dimension_numbers<[1], [0], [0], [1], [0, 0, 1, 1], [], []>} : vector<16x128xbf16>, vector<128x128xbf16>, vector<16x128xf32> -> vector<16x128xf32>
    %c0_3 = arith.constant 0 : index
    %c0_4 = arith.constant 0 : index
    %3 = vector.load %arg3[%c0_3, %c0_4] : memref<1x128xf32, #tpu.memory_space<vmem>>, vector<1x128xf32>
    %4 = vector.broadcast %3 : vector<1x128xf32> to vector<16x128xf32>
    %5 = arith.addf %2, %4 : vector<16x128xf32>
    %cst_5 = arith.constant 0.000000e+00 : f32
    %6 = vector.broadcast %cst_5 : f32 to vector<16x128xf32>
    %7 = arith.maximumf %5, %6 : vector<16x128xf32>
    %8 = arith.truncf %7 : vector<16x128xf32> to vector<16x128xbf16>
    %c0_6 = arith.constant 0 : index
    %c0_7 = arith.constant 0 : index
    %9 = vector.load %arg4[%c0_6, %c0_7] : memref<128x256xbf16, #tpu.memory_space<vmem>>, vector<128x256xbf16>
    %cst_8 = arith.constant dense<0.000000e+00> : vector<16x256xf32>
    %10 = tpu.matmul %8, %9, %cst_8 {dimension_numbers = #tpu.dot_dimension_numbers<[1], [0], [0], [1], [0, 0, 1, 1], [], []>} : vector<16x128xbf16>, vector<128x256xbf16>, vector<16x256xf32> -> vector<16x256xf32>
    %c0_9 = arith.constant 0 : index
    %c0_10 = arith.constant 0 : index
    %11 = vector.load %arg5[%c0_9, %c0_10] : memref<1x256xf32, #tpu.memory_space<vmem>>, vector<1x256xf32>
    %12 = vector.broadcast %11 : vector<1x256xf32> to vector<16x256xf32>
    %13 = arith.addf %10, %12 : vector<16x256xf32>
    %cst_11 = arith.constant 0.000000e+00 : f32
    %14 = vector.broadcast %cst_11 : f32 to vector<16x256xf32>
    %15 = arith.maximumf %13, %14 : vector<16x256xf32>
    %c0_12 = arith.constant 0 : index
    %c0_13 = arith.constant 0 : index
    %16 = vector.load %arg6[%c0_12, %c0_13] : memref<16x256xf32, #tpu.memory_space<vmem>>, vector<16x256xf32>
    tpu.vector_store %arg6[%c0_12, %c0_13], %15 {strides = array<i32>} : memref<16x256xf32, #tpu.memory_space<vmem>>, vector<16x256xf32>,
    return
  }
  func.func @transform_0(%arg0: i32) -> (i32, i32) {
    %c0_i32 = arith.constant 0 : i32
    %c0_i32_0 = arith.constant 0 : i32
    return %arg0, %c0_i32 : i32, i32
  }
  func.func @transform_1(%arg0: i32) -> (i32, i32) {
    %c0_i32 = arith.constant 0 : i32
    %c0_i32_0 = arith.constant 0 : i32
    %c0_i32_1 = arith.constant 0 : i32
    return %c0_i32, %c0_i32_0 : i32, i32
  }
  func.func @transform_2(%arg0: i32) -> (i32, i32) {
    %c0_i32 = arith.constant 0 : i32
    %c0_i32_0 = arith.constant 0 : i32
    %c0_i32_1 = arith.constant 0 : i32
    return %c0_i32, %c0_i32_0 : i32, i32
  }
  func.func @transform_3(%arg0: i32) -> (i32, i32) {
    %c0_i32 = arith.constant 0 : i32
    %c0_i32_0 = arith.constant 0 : i32
    %c0_i32_1 = arith.constant 0 : i32
    return %c0_i32, %c0_i32_0 : i32, i32
  }
  func.func @transform_4(%arg0: i32) -> (i32, i32) {
    %c0_i32 = arith.constant 0 : i32
    %c0_i32_0 = arith.constant 0 : i32
    %c0_i32_1 = arith.constant 0 : i32
    return %c0_i32, %c0_i32_0 : i32, i32
  }
  func.func @transform_5(%arg0: i32) -> (i32, i32) {
    %c0_i32 = arith.constant 0 : i32
    %c0_i32_0 = arith.constant 0 : i32
    return %arg0, %c0_i32 : i32, i32
  }
}

</mosaic_0001>

<llo_original>
// kernel: ner_encoder_fwd.1
$region0: #{ner_encoder_fwd.1}
  #allocation0 [shape = 'u32[]', space=smem, size = 0x4, offset = 0x4, fixed_abs, tag = 'smem constant byte address 0x4 - core index']
  #allocation1 [shape = 'u32[144,128]{1,0:T(1,128)}', space=vmem, size = 0x12000, scoped, tag = 'internal scratch']
  %s0 = inlined_call_operand.vmem [shape: bf16[16,128], index: 0, kind: input, shape index: {}]
  %s1 = inlined_call_operand.hbm [shape: bf16[128,128], index: 1, kind: input, shape index: {}]
  %s2 = inlined_call_operand.vmem [shape: f32[1,128], index: 2, kind: input, shape index: {}]
  %s3 = inlined_call_operand.hbm [shape: bf16[128,256], index: 3, kind: input, shape index: {}]
  %s4 = inlined_call_operand.vmem [shape: f32[1,256], index: 4, kind: input, shape index: {}]
  %s5 = inlined_call_operand.vmem [shape: f32[16,256], index: 5, kind: output, shape index: {}]
  %s6 = sld [smem:[#allocation0]]
  $region38: #{ner_encoder_fwd.1} parent=0
    _
  %s8 = ssub.s32 1, %s6
  %s9 = scalar_select 0, %s8, %s6
  $region1: #{ner_encoder_fwd.1} parent=0
    #allocation2 [shape = 'u8[32768]{0}', space=vmem, size = 0x8000, scoped, tag = 'input window, operand 1, single buffered']
    #allocation3 [shape = 's32[1]{0}', space=sflag, size = 0x4, scoped, tag = 'scoped memory for ner_encoder_fwd.1']
    #allocation4 [shape = 'u8[65536]{0}', space=vmem, size = 0x10000, scoped, tag = 'input window, operand 3, single buffered']
    #allocation5 [shape = 's32[1]{0}', space=sflag, size = 0x4, scoped, tag = 'scoped memory for ner_encoder_fwd.1']
    %10 = vsyncpa [#allocation3], 0
    %11 = vsyncpa [#allocation5], 0
    // Predicated region
    $region2: #{ner_encoder_fwd.1} parent=1 // pred_check
      _
    $region3: #{ner_encoder_fwd.1} parent=1 // pred_check_branch
      %13 = sbr.rel (0) target = $region5
    $region4: #{ner_encoder_fwd.1} parent=1 // pred_region
      _
    $region5: #{ner_encoder_fwd.1} parent=1 // pred_fallthru
      _
    // Predicated region
    $region6: #{ner_encoder_fwd.1} parent=1 // pred_check
      _
    $region7: #{ner_encoder_fwd.1} parent=1 // pred_check_branch
      %15 = sbr.rel (0) target = $region9
    $region8: #{ner_encoder_fwd.1} parent=1 // pred_region
      %s17 = ssub.s32 1024, 1024
      %18 = vsyncadd [#allocation3], %s17
      %s19 = sshll.u32 [#allocation2], 4
      %s20 = int_to_ptr.vmem [resolvable:$true] %s19
      %25 = dma.hbm_to_vmem [thread:$0]  %s1, 1024, %s20, [#allocation3], 64, 64, 4
    $region9: #{ner_encoder_fwd.1} parent=1 // pred_fallthru
      _
    // Predicated region
    $region10: #{ner_encoder_fwd.1} parent=1 // pred_check
      _
    $region11: #{ner_encoder_fwd.1} parent=1 // pred_check_branch
      %27 = sbr.rel (0) target = $region13
    $region12: #{ner_encoder_fwd.1} parent=1 // pred_region
      _
    $region13: #{ner_encoder_fwd.1} parent=1 // pred_fallthru
      _
    // Predicated region
    $region14: #{ner_encoder_fwd.1} parent=1 // pred_check
      _
    $region15: #{ner_encoder_fwd.1} parent=1 // pred_check_branch
      %29 = sbr.rel (0) target = $region17
    $region16: #{ner_encoder_fwd.1} parent=1 // pred_region
      %s31 = ssub.s32 2048, 2048
      %32 = vsyncadd [#allocation5], %s31
      %s33 = sshll.u32 [#allocation4], 4
      %s34 = int_to_ptr.vmem [resolvable:$true] %s33
      %39 = dma.hbm_to_vmem [thread:$0]  %s3, 2048, %s34, [#allocation5], 128, 128, 8
    $region17: #{ner_encoder_fwd.1} parent=1 // pred_fallthru
      _
    // Predicated region
    $region18: #{ner_encoder_fwd.1} parent=1 // pred_check
      _
    $region19: #{ner_encoder_fwd.1} parent=1 // pred_check_branch
      %41 = sbr.rel (0) target = $region21
    $region20: #{ner_encoder_fwd.1} parent=1 // pred_region
      _
    $region21: #{ner_encoder_fwd.1} parent=1 // pred_fallthru
      _
    // Predicated region
    $region22: #{ner_encoder_fwd.1} parent=1 // pred_check
      _
    $region23: #{ner_encoder_fwd.1} parent=1 // pred_check_branch
      %43 = sbr.rel (0) target = $region25
    $region24: #{ner_encoder_fwd.1} parent=1 // pred_region
      %44 = dma.done [#allocation3], 1024
    $region25: #{ner_encoder_fwd.1} parent=1 // pred_fallthru
      _
    // Predicated region
    $region26: #{ner_encoder_fwd.1} parent=1 // pred_check
      _
    $region27: #{ner_encoder_fwd.1} parent=1 // pred_check_branch
      %46 = sbr.rel (0) target = $region29
    $region28: #{ner_encoder_fwd.1} parent=1 // pred_region
      %47 = dma.done [#allocation5], 2048
    $region29: #{ner_encoder_fwd.1} parent=1 // pred_fallthru
      _
    %v49 = vld [vmem:[%s0] sm:$0xf]
    %v50 = vld [vmem:[%s0 + $0x4] sm:$0xf]
    %v51 = vld [vmem:[#allocation2] sm:$0xf]
    %v52 = vld [vmem:[#allocation2 + $0x4] sm:$0xf]
    %v53 = vld [vmem:[#allocation2 + $0x8] sm:$0xf]
    %v54 = vld [vmem:[#allocation2 + $0xc] sm:$0xf]
    %v55 = vld [vmem:[#allocation2 + $0x10] sm:$0xf]
    %v56 = vld [vmem:[#allocation2 + $0x14] sm:$0xf]
    %v57 = vld [vmem:[#allocation2 + $0x18] sm:$0xf]
    %v58 = vld [vmem:[#allocation2 + $0x1c] sm:$0xf]
    %v59 = vld [vmem:[#allocation2 + $0x20] sm:$0xf]
    %v60 = vld [vmem:[#allocation2 + $0x24] sm:$0xf]
    %v61 = vld [vmem:[#allocation2 + $0x28] sm:$0xf]
    %v62 = vld [vmem:[#allocation2 + $0x2c] sm:$0xf]
    %v63 = vld [vmem:[#allocation2 + $0x30] sm:$0xf]
    %v64 = vld [vmem:[#allocation2 + $0x34] sm:$0xf]
    %v65 = vld [vmem:[#allocation2 + $0x38] sm:$0xf]
    %v66 = vld [vmem:[#allocation2 + $0x3c] sm:$0xf]
    %v67 = vld [vmem:[%s2] sm:$0x1]
    %v69 = vlaneseq
    %v70 = vshrl.u32 %v69, 7
    %v71 = vsub.s32 0, %v70
    %v72 = vrot.slane %v67, %v71
    %v76 = vunpack.c.l.b16 %v49
    %v77 = vunpack.c.l.b16 %v50
    %v78 = vpack.c.b16 %v77, %v76
    %v96 = vunpack.c.l.b16 %v51
    %v97 = vunpack.c.l.b16 %v52
    %v98 = vunpack.c.l.b16 %v53
    %v99 = vunpack.c.l.b16 %v54
    %v100 = vunpack.c.l.b16 %v55
    %v101 = vunpack.c.l.b16 %v56
    %v102 = vunpack.c.l.b16 %v57
    %v103 = vunpack.c.l.b16 %v58
    %v104 = vunpack.c.l.b16 %v59
    %v105 = vunpack.c.l.b16 %v60
    %v106 = vunpack.c.l.b16 %v61
    %v107 = vunpack.c.l.b16 %v62
    %v108 = vunpack.c.l.b16 %v63
    %v109 = vunpack.c.l.b16 %v64
    %v110 = vunpack.c.l.b16 %v65
    %v111 = vunpack.c.l.b16 %v66
    %v112 = vpack.c.b16 %v97, %v96
    %v113 = vpack.c.b16 %v99, %v98
    %v114 = vpack.c.b16 %v101, %v100
    %v115 = vpack.c.b16 %v103, %v102
    %v116 = vpack.c.b16 %v105, %v104
    %v117 = vpack.c.b16 %v107, %v106
    %v118 = vpack.c.b16 %v109, %v108
    %v119 = vpack.c.b16 %v111, %v110
    %128 = vmatprep.subr.bf16.mxu0 0
    %129 = vmatpush1.bf16.msra.mxu0 %v119
    %130 = vmatprep.subr.bf16.mxu0 0
    %131 = vmatpush1.bf16.msra.mxu0 %v118
    %132 = vmatprep.subr.bf16.mxu0 0
    %133 = vmatpush1.bf16.msra.mxu0 %v117
    %134 = vmatprep.subr.bf16.mxu0 0
    %135 = vmatpush1.bf16.msra.mxu0 %v116
    %136 = vmatprep.subr.bf16.mxu0 0
    %137 = vmatpush1.bf16.msra.mxu0 %v115
    %138 = vmatprep.subr.bf16.mxu0 0
    %139 = vmatpush1.bf16.msra.mxu0 %v114
    %140 = vmatprep.subr.bf16.mxu0 0
    %141 = vmatpush1.bf16.msra.mxu0 %v113
    %142 = vmatprep.subr.bf16.mxu0 0
    %143 = vmatpush1.bf16.msra.mxu0 %v112
    %144 = vmatprep.subr.bf16.mxu0 0
    %145 = vmatpush2.bf16.msra.mxu0 0
    %146 = vmatprep.subr.bf16.mxu0 0
    %147 = vmatpush2.bf16.msra.mxu0 0
    %148 = vmatprep.subr.bf16.mxu0 0
    %149 = vmatpush2.bf16.msra.mxu0 0
    %150 = vmatprep.subr.bf16.mxu0 0
    %151 = vmatpush2.bf16.msra.mxu0 0
    %152 = vmatprep.subr.bf16.mxu0 0
    %153 = vmatpush2.bf16.msra.mxu0 0
    %154 = vmatprep.subr.bf16.mxu0 0
    %155 = vmatpush2.bf16.msra.mxu0 0
    %156 = vmatprep.subr.bf16.mxu0 0
    %157 = vmatpush2.bf16.msra.mxu0 0
    %158 = vmatprep.subr.bf16.mxu0 0
    %159 = vmatpush2.bf16.msra.mxu0 0
    %160 = vmatprep.mubr.bf16.mxu0 0
    %161 = vmatmul.mubr.bf16.gmra.mxu0 %v78
    %v162 = vpop.f32.mrf.mxu0
    %v163 = vadd.f32 %v72, %v162
    %v164 = vpop.f32.mrf.mxu0
    %v165 = vpop.f32.mrf.mxu0
    %v166 = vadd.f32 %v72, %v165
    %v167 = vpop.f32.mrf.mxu0
    %168 = vdwg.mxu0
    %v169 = vmax.f32 %v163, 0.0
    %v170 = vmax.f32 %v166, 0.0
    %v171 = vpack.c.bf16 %v170, %v169
    %v172 = vld [vmem:[#allocation4] sm:$0xff]
    %v173 = vld [vmem:[#allocation4 + $0x8] sm:$0xff]
    %v174 = vld [vmem:[#allocation4 + $0x10] sm:$0xff]
    %v175 = vld [vmem:[#allocation4 + $0x18] sm:$0xff]
    %v176 = vld [vmem:[#allocation4 + $0x20] sm:$0xff]
    %v177 = vld [vmem:[#allocation4 + $0x28] sm:$0xff]
    %v178 = vld [vmem:[#allocation4 + $0x30] sm:$0xff]
    %v179 = vld [vmem:[#allocation4 + $0x38] sm:$0xff]
    %v180 = vld [vmem:[#allocation4 + $0x40] sm:$0xff]
    %v181 = vld [vmem:[#allocation4 + $0x48] sm:$0xff]
    %v182 = vld [vmem:[#allocation4 + $0x50] sm:$0xff]
    %v183 = vld [vmem:[#allocation4 + $0x58] sm:$0xff]
    %v184 = vld [vmem:[#allocation4 + $0x60] sm:$0xff]
    %v185 = vld [vmem:[#allocation4 + $0x68] sm:$0xff]
    %v186 = vld [vmem:[#allocation4 + $0x70] sm:$0xff]
    %v187 = vld [vmem:[#allocation4 + $0x78] sm:$0xff]
    %v188 = vld [vmem:[%s4] sm:$0x3]
    %v190 = vlaneseq
    %v191 = vshrl.u32 %v190, 7
    %v192 = vsub.s32 0, %v191
    %v193 = vrot.slane %v188, %v192
    %v194 = vlaneseq
    %v195 = vshrl.u32 %v194, 7
    %v196 = vsub.s32 1, %v195
    %v197 = vrot.slane %v188, %v196
    %v216 = vunpack.c.l.b16 %v172
    %v217 = vunpack.c.h.b16 %v172
    %v218 = vunpack.c.l.b16 %v173
    %v219 = vunpack.c.h.b16 %v173
    %v220 = vunpack.c.l.b16 %v174
    %v221 = vunpack.c.h.b16 %v174
    %v222 = vunpack.c.l.b16 %v175
    %v223 = vunpack.c.h.b16 %v175
    %v224 = vunpack.c.l.b16 %v176
    %v225 = vunpack.c.h.b16 %v176
    %v226 = vunpack.c.l.b16 %v177
    %v227 = vunpack.c.h.b16 %v177
    %v228 = vunpack.c.l.b16 %v178
    %v229 = vunpack.c.h.b16 %v178
    %v230 = vunpack.c.l.b16 %v179
    %v231 = vunpack.c.h.b16 %v179
    %v232 = vunpack.c.l.b16 %v180
    %v233 = vunpack.c.h.b16 %v180
    %v234 = vunpack.c.l.b16 %v181
    %v235 = vunpack.c.h.b16 %v181
    %v236 = vunpack.c.l.b16 %v182
    %v237 = vunpack.c.h.b16 %v182
    %v238 = vunpack.c.l.b16 %v183
    %v239 = vunpack.c.h.b16 %v183
    %v240 = vunpack.c.l.b16 %v184
    %v241 = vunpack.c.h.b16 %v184
    %v242 = vunpack.c.l.b16 %v185
    %v243 = vunpack.c.h.b16 %v185
    %v244 = vunpack.c.l.b16 %v186
    %v245 = vunpack.c.h.b16 %v186
    %v246 = vunpack.c.l.b16 %v187
    %v247 = vunpack.c.h.b16 %v187
    %v248 = vpack.c.b16 %v218, %v216
    %v249 = vpack.c.b16 %v219, %v217
    %v250 = vpack.c.b16 %v222, %v220
    %v251 = vpack.c.b16 %v223, %v221
    %v252 = vpack.c.b16 %v226, %v224
    %v253 = vpack.c.b16 %v227, %v225
    %v254 = vpack.c.b16 %v230, %v228
    %v255 = vpack.c.b16 %v231, %v229
    %v256 = vpack.c.b16 %v234, %v232
    %v257 = vpack.c.b16 %v235, %v233
    %v258 = vpack.c.b16 %v238, %v236
    %v259 = vpack.c.b16 %v239, %v237
    %v260 = vpack.c.b16 %v242, %v240
    %v261 = vpack.c.b16 %v243, %v241
    %v262 = vpack.c.b16 %v246, %v244
    %v263 = vpack.c.b16 %v247, %v245
    %280 = vmatprep.subr.bf16.mxu0 %v263
    %281 = vmatpush1.bf16.msra.mxu0 %v262
    %282 = vmatprep.subr.bf16.mxu0 %v261
    %283 = vmatpush1.bf16.msra.mxu0 %v260
    %284 = vmatprep.subr.bf16.mxu0 %v259
    %285 = vmatpush1.bf16.msra.mxu0 %v258
    %286 = vmatprep.subr.bf16.mxu0 %v257
    %287 = vmatpush1.bf16.msra.mxu0 %v256
    %288 = vmatprep.subr.bf16.mxu0 %v255
    %289 = vmatpush1.bf16.msra.mxu0 %v254
    %290 = vmatprep.subr.bf16.mxu0 %v253
    %291 = vmatpush1.bf16.msra.mxu0 %v252
    %292 = vmatprep.subr.bf16.mxu0 %v251
    %293 = vmatpush1.bf16.msra.mxu0 %v250
    %294 = vmatprep.subr.bf16.mxu0 %v249
    %295 = vmatpush1.bf16.msra.mxu0 %v248
    %296 = vmatprep.subr.bf16.mxu0 0
    %297 = vmatpush2.bf16.msra.mxu0 0
    %298 = vmatprep.subr.bf16.mxu0 0
    %299 = vmatpush2.bf16.msra.mxu0 0
    %300 = vmatprep.subr.bf16.mxu0 0
    %301 = vmatpush2.bf16.msra.mxu0 0
    %302 = vmatprep.subr.bf16.mxu0 0
    %303 = vmatpush2.bf16.msra.mxu0 0
    %304 = vmatprep.subr.bf16.mxu0 0
    %305 = vmatpush2.bf16.msra.mxu0 0
    %306 = vmatprep.subr.bf16.mxu0 0
    %307 = vmatpush2.bf16.msra.mxu0 0
    %308 = vmatprep.subr.bf16.mxu0 0
    %309 = vmatpush2.bf16.msra.mxu0 0
    %310 = vmatprep.subr.bf16.mxu0 0
    %311 = vmatpush2.bf16.msra.mxu0 0
    %312 = vmatprep.mubr.bf16.mxu0 0
    %313 = vmatmul.mubr.bf16.gmra.mxu0 %v171
    %v314 = vpop.f32.mrf.mxu0
    %v315 = vadd.f32 %v193, %v314
    %v316 = vpop.f32.mrf.mxu0
    %v317 = vadd.f32 %v197, %v316
    %v318 = vpop.f32.mrf.mxu0
    %v319 = vadd.f32 %v193, %v318
    %v320 = vpop.f32.mrf.mxu0
    %v321 = vadd.f32 %v197, %v320
    %322 = vdwg.mxu0
    %v323 = vmax.f32 %v315, 0.0
    %v324 = vmax.f32 %v317, 0.0
    %v325 = vmax.f32 %v319, 0.0
    %v326 = vmax.f32 %v321, 0.0
    %327 = vst [vmem:[%s5] sm:$0xff] %v323
    %328 = vst [vmem:[%s5 + $0x8] sm:$0xff] %v324
    %329 = vst [vmem:[%s5 + $0x10] sm:$0xff] %v325
    %330 = vst [vmem:[%s5 + $0x18] sm:$0xff] %v326
    // Predicated region
    $region30: #{ner_encoder_fwd.1} parent=1 // pred_check
      _
    $region31: #{ner_encoder_fwd.1} parent=1 // pred_check_branch
      %332 = sbr.rel (0) target = $region33
    $region32: #{ner_encoder_fwd.1} parent=1 // pred_region
      _
    $region33: #{ner_encoder_fwd.1} parent=1 // pred_fallthru
      _
    // Predicated region
    $region34: #{ner_encoder_fwd.1} parent=1 // pred_check
      _
    $region35: #{ner_encoder_fwd.1} parent=1 // pred_check_branch
      %334 = sbr.rel (0) target = $region37
    $region36: #{ner_encoder_fwd.1} parent=1 // pred_region
      _
    $region37: #{ner_encoder_fwd.1} parent=1 // pred_fallthru
      _
    %335 = vsyncpa [#allocation3], 1
    %336 = vsyncpa [#allocation5], 1

</llo_original>
